<compile_context>
chip_gen: v5e
topology: v5e:2x2
jax: 0.10.0
libtpu: 0.0.40
codegen_flags: <defaults>
</compile_context>

<pallas_src>
import functools

import jax
import jax.numpy as jnp
from jax.experimental import pallas as pl
from jax.experimental.pallas import tpu as pltpu

EPS = 1e-8


def gvp_block_kernel(s_ref, v_ref, whb_ref, wss_ref, wsv_ref, bs_ref, wvb_ref,
                     out_ref, *, h, so):
    # s_ref   : [tn, si]        scalar features (input dtype, fed to MXU as-is)
    # v_ref   : [tn, 3*vi]      coord-major lanes: col c*vi + j = V[n, j, c]
    # whb_ref : [3*vi, 3*h]     block-diag(Wh, Wh, Wh), input dtype
    # wss_ref : [si, so]        Ws (scalar part), input dtype
    # wsv_ref : [h, so]         Ws (vector-norm part), f32
    # bs_ref  : [1, so]         Ws bias, f32
    # wvb_ref : [3*h, 3*vo]     block-diag(Wv, Wv, Wv), f32
    # out_ref : [tn, so+3*vo]   fused output: [:, :so] = s_out, [:, so:] = V_out(2d)
    f32 = jnp.float32

    # vh[n, c*h + k] = sum_j V[n, j, c] * Wh[j, k]   (single MXU pass, f32 acc)
    vh = jnp.dot(v_ref[...], whb_ref[...], preferred_element_type=f32)  # [tn, 3*h]

    # _norm_no_nan over the coordinate axis via static lane slices (no reshape)
    sq = vh * vh
    vn = jnp.sqrt(jnp.maximum(
        sq[:, 0:h] + sq[:, h:2 * h] + sq[:, 2 * h:3 * h], EPS))         # [tn, h] f32

    # scalar path: s @ Wss + vn @ Wsv + bs   (two small MXU passes, no concat)
    s_out = (jnp.dot(s_ref[...], wss_ref[...], preferred_element_type=f32)
             + jnp.dot(vn, wsv_ref[...], preferred_element_type=f32)
             + bs_ref[...])                                             # [tn, so]

    # vector output stays in the coord-major 2-D lane layout
    v_out = jnp.dot(vh, wvb_ref[...], preferred_element_type=f32)       # [tn, 3*vo]

    # fused writeback tile (one output DMA stream per grid step)
    out_ref[:, 0:so] = s_out.astype(out_ref.dtype)
    out_ref[:, so:] = v_out.astype(out_ref.dtype)

    # TODO(synk): n_layers > 1, activations, vector_gate, dropout, skip and
    # LayerNorm branches of GVPBlock are dead under the default constructor
    # args and are not implemented here.


def _device_params():
    """Generation-aware tiling knobs, keyed off per-core VMEM capacity."""
    vmem_bytes = 64 * 1024 * 1024  # conservative fallback (v7x-class)
    try:
        vmem_bytes = int(getattr(pltpu.get_tpu_info(), "vmem_capacity_bytes",
                                 vmem_bytes))
    except Exception:
        pass
    if vmem_bytes >= 128 * 1024 * 1024:
        # v5e / v6e: 128 MiB VMEM, 1 TensorCore -> big tiles, raised limit.
        return 8192, 96 * 1024 * 1024, 2
    # v7x-class: 64 MiB VMEM per TC, 2 TCs -> smaller tiles, >=2 steps per TC.
    return 4096, 48 * 1024 * 1024, 4


def _pick_row_tile(n, tn_cap, min_steps):
    """Largest multiple-of-8 row tile <= tn_cap, keeping at least `min_steps`
    grid steps when there are enough rows (>=2 steps per TensorCore on v7x,
    and some step-to-step overlap for the pipeline)."""
    tn = max(8, (min(tn_cap, n) // 8) * 8)
    if n >= min_steps * 8:
        tn = min(tn, max(8, (pl.cdiv(n, min_steps) // 8) * 8))
    return tn


def gvp_block(s, v, wh, wss, wsv, bs, wv):
    """s: [N, si], v: [N, vi, 3] (PyTorch layout).  Inputs may be f32 or bf16;
    MXU consumes them directly, accumulation is f32.  Returns
    (s_out [N, so], v_out [N, vo, 3]) in the input dtypes."""
    n, si = s.shape
    vi = v.shape[1]
    h = wh.shape[1]
    so = wss.shape[1]
    vo = wv.shape[1]

    out_dtype = jnp.promote_types(s.dtype, v.dtype)

    # ---- XLA-side layout glue & weight prep (tiny, done once) ----
    v2d = jnp.swapaxes(v, -1, -2).reshape(n, 3 * vi)          # coord-major lanes
    whb = jnp.kron(jnp.eye(3, dtype=wh.dtype), wh).astype(v.dtype)   # [3vi, 3h]
    wss_c = wss.astype(s.dtype)                               # [si, so]
    wsv_c = wsv.astype(jnp.float32)                           # [h, so]  (f32 lhs)
    bs_c = bs.astype(jnp.float32)                             # [1, so]
    wvb = jnp.kron(jnp.eye(3, dtype=wv.dtype),
                   wv).astype(jnp.float32)                    # [3h, 3vo] (f32 lhs)

    tn_cap, vmem_limit, min_steps = _device_params()
    tn = _pick_row_tile(n, tn_cap, min_steps)
    n_pad = pl.cdiv(n, tn) * tn
    if n_pad != n:
        s = jnp.pad(s, ((0, n_pad - n), (0, 0)))
        v2d = jnp.pad(v2d, ((0, n_pad - n), (0, 0)))

    grid = (n_pad // tn,)
    kernel = functools.partial(gvp_block_kernel, h=h, so=so)

    fused = pl.pallas_call(
        kernel,
        out_shape=jax.ShapeDtypeStruct((n_pad, so + 3 * vo), out_dtype),
        grid=grid,
        in_specs=[
            pl.BlockSpec((tn, si), lambda i: (i, 0)),
            pl.BlockSpec((tn, 3 * vi), lambda i: (i, 0)),
            # weights: constant index_map -> stay VMEM resident across the grid
            pl.BlockSpec((3 * vi, 3 * h), lambda i: (0, 0)),
            pl.BlockSpec((si, so), lambda i: (0, 0)),
            pl.BlockSpec((h, so), lambda i: (0, 0)),
            pl.BlockSpec((1, so), lambda i: (0, 0)),
            pl.BlockSpec((3 * h, 3 * vo), lambda i: (0, 0)),
        ],
        out_specs=pl.BlockSpec((tn, so + 3 * vo), lambda i: (i, 0)),
        compiler_params=pltpu.CompilerParams(
            dimension_semantics=("parallel",),
            vmem_limit_bytes=vmem_limit,
        ),
    )(s, v2d, whb, wss_c, wsv_c, bs_c, wvb)

    fused = fused[:n]
    s_out = fused[:, :so].astype(s.dtype)
    v_out = jnp.swapaxes(fused[:, so:].reshape(n, 3, vo), -1, -2).astype(v.dtype)
    return s_out, v_out


def gvp_block_ref(s, v, wh, wss, wsv, bs, wv):
    """Pure-JAX reference mirroring the PyTorch GVP forward (no activations)."""
    s = s.astype(jnp.float32)
    v = v.astype(jnp.float32)
    vt = jnp.swapaxes(v, -1, -2)                                   # [N, 3, vi]
    vh = vt @ wh                                                   # [N, 3, h]
    vn = jnp.sqrt(jnp.maximum(jnp.sum(vh * vh, axis=-2), EPS))     # [N, h]
    s_out = s @ wss + vn @ wsv + bs[0]                             # [N, so]
    v_out = jnp.swapaxes(vh @ wv, -1, -2)                          # [N, vo, 3]
    return s_out, v_out


if __name__ == "__main__":
    # dims: in_dims=(si, vi)=(16, 4), out_dims=(so, vo)=(32, 8), h=max(vi,vo)=8
    N, SI, VI, SO, VO = 64, 16, 4, 32, 8
    H = max(VI, VO)

    key = jax.random.PRNGKey(0)
    ks = jax.random.split(key, 7)
    s = jax.random.normal(ks[0], (N, SI), jnp.float32)
    v = jax.random.normal(ks[1], (N, VI, 3), jnp.float32)

    # deterministic synthetic parameters (right-multiply form)
    wh = jax.random.normal(ks[2], (VI, H), jnp.float32) * 0.3    # Wh (no bias)
    wss = jax.random.normal(ks[3], (SI, SO), jnp.float32) * 0.1  # Ws[:, :si]
    wsv = jax.random.normal(ks[4], (H, SO), jnp.float32) * 0.1   # Ws[:, si:]
    bs = jax.random.normal(ks[5], (1, SO), jnp.float32) * 0.05   # Ws bias
    wv = jax.random.normal(ks[6], (H, VO), jnp.float32) * 0.3    # Wv (no bias)

    # --- f32 path (tight tolerance) ---
    s_out, v_out = gvp_block(s, v, wh, wss, wsv, bs, wv)
    jax.block_until_ready((s_out, v_out))
    s_ref, v_ref = gvp_block_ref(s, v, wh, wss, wsv, bs, wv)
    assert s_out.shape == (N, SO) and v_out.shape == (N, VO, 3)
    assert jnp.allclose(s_out, s_ref, atol=1e-5, rtol=1e-5)
    assert jnp.allclose(v_out, v_ref, atol=1e-5, rtol=1e-5)

    # --- bf16 HBM-storage path (bf16 fed straight to the MXU, f32 accumulate) ---
    s16 = s.astype(jnp.bfloat16)
    v16 = v.astype(jnp.bfloat16)
    s_out16, v_out16 = gvp_block(s16, v16, wh, wss, wsv, bs, wv)
    jax.block_until_ready((s_out16, v_out16))
    s_ref16, v_ref16 = gvp_block_ref(s16, v16, wh, wss, wsv, bs, wv)
    assert s_out16.dtype == jnp.bfloat16 and v_out16.dtype == jnp.bfloat16
    assert jnp.allclose(s_out16.astype(jnp.float32), s_ref16, atol=5e-2, rtol=5e-2)
    assert jnp.allclose(v_out16.astype(jnp.float32), v_ref16, atol=5e-2, rtol=5e-2)

    print("KERNEL_OK")
</pallas_src>

<mosaic_0001>
module attributes {stable_mosaic.version = 11 : i64} {
  func.func @gvp_block_kernel(%arg0: i32, %arg1: memref<16x16xf32, #tpu.memory_space<vmem>>, %arg2: memref<16x12xf32, #tpu.memory_space<vmem>>, %arg3: memref<12x24xf32, #tpu.memory_space<vmem>>, %arg4: memref<16x32xf32, #tpu.memory_space<vmem>>, %arg5: memref<8x32xf32, #tpu.memory_space<vmem>>, %arg6: memref<1x32xf32, #tpu.memory_space<vmem>>, %arg7: memref<24x24xf32, #tpu.memory_space<vmem>>, %arg8: memref<16x56xf32, #tpu.memory_space<vmem>>) attributes {dimension_semantics = [#tpu.dimension_semantics<parallel>], iteration_bounds = array<i64: 4>, scalar_prefetch = 0 : i64, scratch_operands = 0 : i64, tpu.core_type = #tpu.core_type<tc>, window_params = [{transform_indices = @transform_0, window_bounds = array<i64: 16, 16>}, {transform_indices = @transform_1, window_bounds = array<i64: 16, 12>}, {pipeline_mode = #tpu.pipeline_mode<synchronous>, transform_indices = @transform_2, window_bounds = array<i64: 12, 24>}, {pipeline_mode = #tpu.pipeline_mode<synchronous>, transform_indices = @transform_3, window_bounds = array<i64: 16, 32>}, {pipeline_mode = #tpu.pipeline_mode<synchronous>, transform_indices = @transform_4, window_bounds = array<i64: 8, 32>}, {pipeline_mode = #tpu.pipeline_mode<synchronous>, transform_indices = @transform_5, window_bounds = array<i64: 1, 32>}, {pipeline_mode = #tpu.pipeline_mode<synchronous>, transform_indices = @transform_6, window_bounds = array<i64: 24, 24>}, {transform_indices = @transform_7, window_bounds = array<i64: 16, 56>}]} {
    %c0 = arith.constant 0 : index
    %c0_0 = arith.constant 0 : index
    %0 = vector.load %arg2[%c0, %c0_0] : memref<16x12xf32, #tpu.memory_space<vmem>>, vector<16x12xf32>
    %c0_1 = arith.constant 0 : index
    %c0_2 = arith.constant 0 : index
    %1 = vector.load %arg3[%c0_1, %c0_2] : memref<12x24xf32, #tpu.memory_space<vmem>>, vector<12x24xf32>
    %cst = arith.constant dense<0.000000e+00> : vector<16x24xf32>
    %2 = tpu.matmul %0, %1, %cst {dimension_numbers = #tpu.dot_dimension_numbers<[1], [0], [0], [1], [0, 0, 1, 1], [], []>} : vector<16x12xf32>, vector<12x24xf32>, vector<16x24xf32> -> vector<16x24xf32>
    %3 = arith.mulf %2, %2 : vector<16x24xf32>
    %4 = vector.extract_strided_slice %3 {offsets = [0, 0], sizes = [16, 8], strides = [1, 1]} : vector<16x24xf32> to vector<16x8xf32>
    %5 = vector.extract_strided_slice %3 {offsets = [0, 8], sizes = [16, 8], strides = [1, 1]} : vector<16x24xf32> to vector<16x8xf32>
    %6 = arith.addf %4, %5 : vector<16x8xf32>
    %7 = vector.extract_strided_slice %3 {offsets = [0, 16], sizes = [16, 8], strides = [1, 1]} : vector<16x24xf32> to vector<16x8xf32>
    %8 = arith.addf %6, %7 : vector<16x8xf32>
    %cst_3 = arith.constant 9.99999993E-9 : f32
    %9 = vector.broadcast %cst_3 : f32 to vector<16x8xf32>
    %10 = arith.maximumf %8, %9 : vector<16x8xf32>
    %11 = math.sqrt %10 : vector<16x8xf32>
    %c0_4 = arith.constant 0 : index
    %c0_5 = arith.constant 0 : index
    %12 = vector.load %arg1[%c0_4, %c0_5] : memref<16x16xf32, #tpu.memory_space<vmem>>, vector<16x16xf32>
    %c0_6 = arith.constant 0 : index
    %c0_7 = arith.constant 0 : index
    %13 = vector.load %arg4[%c0_6, %c0_7] : memref<16x32xf32, #tpu.memory_space<vmem>>, vector<16x32xf32>
    %cst_8 = arith.constant dense<0.000000e+00> : vector<16x32xf32>
    %14 = tpu.matmul %12, %13, %cst_8 {dimension_numbers = #tpu.dot_dimension_numbers<[1], [0], [0], [1], [0, 0, 1, 1], [], []>} : vector<16x16xf32>, vector<16x32xf32>, vector<16x32xf32> -> vector<16x32xf32>
    %c0_9 = arith.constant 0 : index
    %c0_10 = arith.constant 0 : index
    %15 = vector.load %arg5[%c0_9, %c0_10] : memref<8x32xf32, #tpu.memory_space<vmem>>, vector<8x32xf32>
    %cst_11 = arith.constant dense<0.000000e+00> : vector<16x32xf32>
    %16 = tpu.matmul %11, %15, %cst_11 {dimension_numbers = #tpu.dot_dimension_numbers<[1], [0], [0], [1], [0, 0, 1, 1], [], []>} : vector<16x8xf32>, vector<8x32xf32>, vector<16x32xf32> -> vector<16x32xf32>
    %17 = arith.addf %14, %16 : vector<16x32xf32>
    %c0_12 = arith.constant 0 : index
    %c0_13 = arith.constant 0 : index
    %18 = vector.load %arg6[%c0_12, %c0_13] : memref<1x32xf32, #tpu.memory_space<vmem>>, vector<1x32xf32>
    %19 = vector.broadcast %18 : vector<1x32xf32> to vector<16x32xf32>
    %20 = arith.addf %17, %19 : vector<16x32xf32>
    %c0_14 = arith.constant 0 : index
    %c0_15 = arith.constant 0 : index
    %21 = vector.load %arg7[%c0_14, %c0_15] : memref<24x24xf32, #tpu.memory_space<vmem>>, vector<24x24xf32>
    %cst_16 = arith.constant dense<0.000000e+00> : vector<16x24xf32>
    %22 = tpu.matmul %2, %21, %cst_16 {dimension_numbers = #tpu.dot_dimension_numbers<[1], [0], [0], [1], [0, 0, 1, 1], [], []>} : vector<16x24xf32>, vector<24x24xf32>, vector<16x24xf32> -> vector<16x24xf32>
    %c0_17 = arith.constant 0 : index
    %c0_18 = arith.constant 0 : index
    %23 = vector.load %arg8[%c0_17, %c0_18] : memref<16x56xf32, #tpu.memory_space<vmem>>, vector<16x32xf32>
    tpu.vector_store %arg8[%c0_17, %c0_18], %20 {strides = array<i32>} : memref<16x56xf32, #tpu.memory_space<vmem>>, vector<16x32xf32>,
    %c0_19 = arith.constant 0 : index
    %c32 = arith.constant 32 : index
    %24 = vector.load %arg8[%c0_19, %c32] : memref<16x56xf32, #tpu.memory_space<vmem>>, vector<16x24xf32>
    tpu.vector_store %arg8[%c0_19, %c32], %22 {strides = array<i32>} : memref<16x56xf32, #tpu.memory_space<vmem>>, vector<16x24xf32>,
    return
  }
  func.func @transform_0(%arg0: i32) -> (i32, i32) {
    %c0_i32 = arith.constant 0 : i32
    %c0_i32_0 = arith.constant 0 : i32
    return %arg0, %c0_i32 : i32, i32
  }
  func.func @transform_1(%arg0: i32) -> (i32, i32) {
    %c0_i32 = arith.constant 0 : i32
    %c0_i32_0 = arith.constant 0 : i32
    return %arg0, %c0_i32 : i32, i32
  }
  func.func @transform_2(%arg0: i32) -> (i32, i32) {
    %c0_i32 = arith.constant 0 : i32
    %c0_i32_0 = arith.constant 0 : i32
    %c0_i32_1 = arith.constant 0 : i32
    return %c0_i32, %c0_i32_0 : i32, i32
  }
  func.func @transform_3(%arg0: i32) -> (i32, i32) {
    %c0_i32 = arith.constant 0 : i32
    %c0_i32_0 = arith.constant 0 : i32
    %c0_i32_1 = arith.constant 0 : i32
    return %c0_i32, %c0_i32_0 : i32, i32
  }
  func.func @transform_4(%arg0: i32) -> (i32, i32) {
    %c0_i32 = arith.constant 0 : i32
    %c0_i32_0 = arith.constant 0 : i32
    %c0_i32_1 = arith.constant 0 : i32
    return %c0_i32, %c0_i32_0 : i32, i32
  }
  func.func @transform_5(%arg0: i32) -> (i32, i32) {
    %c0_i32 = arith.constant 0 : i32
    %c0_i32_0 = arith.constant 0 : i32
    %c0_i32_1 = arith.constant 0 : i32
    return %c0_i32, %c0_i32_0 : i32, i32
  }
  func.func @transform_6(%arg0: i32) -> (i32, i32) {
    %c0_i32 = arith.constant 0 : i32
    %c0_i32_0 = arith.constant 0 : i32
    %c0_i32_1 = arith.constant 0 : i32
    return %c0_i32, %c0_i32_0 : i32, i32
  }
  func.func @transform_7(%arg0: i32) -> (i32, i32) {
    %c0_i32 = arith.constant 0 : i32
    %c0_i32_0 = arith.constant 0 : i32
    return %arg0, %c0_i32 : i32, i32
  }
}

</mosaic_0001>

<llo_original>
// kernel: tpu_custom_call.1
$region0: #{tpu_custom_call.1}
  #allocation0 [shape = 'u32[]', space=smem, size = 0x4, offset = 0x4, fixed_abs, tag = 'smem constant byte address 0x4 - core index']
  #allocation1 [shape = 'u32[72,128]{1,0:T(1,128)}', space=vmem, size = 0x9000, scoped, tag = 'internal scratch']
  %s0 = inlined_call_operand.vmem [shape: f32[64,16], index: 0, kind: input, shape index: {}]
  %s1 = inlined_call_operand.vmem [shape: f32[64,12], index: 1, kind: input, shape index: {}]
  %s2 = inlined_call_operand.vmem [shape: f32[12,24], index: 2, kind: input, shape index: {}]
  %s3 = inlined_call_operand.vmem [shape: f32[16,32], index: 3, kind: input, shape index: {}]
  %s4 = inlined_call_operand.vmem [shape: f32[8,32], index: 4, kind: input, shape index: {}]
  %s5 = inlined_call_operand.vmem [shape: f32[1,32], index: 5, kind: input, shape index: {}]
  %s6 = inlined_call_operand.vmem [shape: f32[24,24], index: 6, kind: input, shape index: {}]
  %s7 = inlined_call_operand.vmem [shape: f32[64,56], index: 7, kind: output, shape index: {}]
  %s8 = sld [smem:[#allocation0]]
  $region61: #{tpu_custom_call.1} parent=0
    _
  %s10 = ssub.s32 1, %s8
  %s11 = scalar_select 0, %s10, %s8
  loop: start=0, step=1, limit=6
  $region2: #{tpu_custom_call.1} parent=0 // loop_pre_header
    _
  $region3: #{tpu_custom_call.1} parent=0 // loop_header
    %s13 = sphi 0, %s17
    %p14 = scmp.ge.s32.totalorder %s13, 6
    %s23 = sphi 0, %s25
    %s26 = sphi 0, %s23
    %s27 = sphi 0, %s26
    %s43 = sphi 0, %s27
    %s49 = sphi 0, %s51
    %s52 = sphi 0, %s49
    %s53 = sphi 0, %s52
    %s69 = sphi 0, %s53
    %s73 = sphi 0, %s73
    %s75 = sphi 0, %s73
    %s76 = sphi 0, %s75
    %s90 = sphi 0, %s76
    %s94 = sphi 0, %s94
    %s96 = sphi 0, %s94
    %s97 = sphi 0, %s96
    %s111 = sphi 0, %s97
    %s115 = sphi 0, %s115
    %s117 = sphi 0, %s115
    %s118 = sphi 0, %s117
    %s132 = sphi 0, %s118
    %s136 = sphi 0, %s136
    %s138 = sphi 0, %s136
    %s139 = sphi 0, %s138
    %s153 = sphi 0, %s139
    %s157 = sphi 0, %s157
    %s159 = sphi 0, %s157
    %s160 = sphi 0, %s159
    %s174 = sphi 0, %s160
    %s180 = sphi 0, %s182
    %s183 = sphi 0, %s180
    %s184 = sphi 0, %s183
    %s200 = sphi 0, %s184
  $region4: #{tpu_custom_call.1} parent=0 // loop_header_branch
    %16 = sbr.rel (%p14) target = $region8
  $region5: #{tpu_custom_call.1} parent=0 // loop_body
    %s18 = ssub.s32 %s13, 1
    %s19 = ssub.s32 %s13, 2
    %s20 = sadd.s32 %s13, 1
    %s21 = ssub.s32 %s13, %s20
    %p22 = scmp.eq.s32.totalorder %s21, 0
    %s24 = sadd.s32 %s23, 1
    %s25 = scalar_select %p22, %s23, %s24
    %p28 = pneg %p22
    %p29 = scmp.eq.s32.totalorder %s13, 3
    %p30 = por %p28, %p29
    %p31 = scmp.ne.s32.totalorder %s23, %s26
    %p32 = scmp.eq.s32.totalorder %s13, 0
    %p33 = por %p31, %p32
    %p34 = scmp.ne.s32.totalorder %s23, %s26
    %p35 = scmp.eq.s32.totalorder %s18, 3
    %p36 = por %p34, %p35
    %p37 = scmp.ne.s32.totalorder %s26, %s27
    %p38 = scmp.eq.s32.totalorder %s18, 0
    %p39 = por %p37, %p38
    %p40 = scmp.ne.s32.totalorder %s26, %s27
    %p41 = scmp.eq.s32.totalorder %s19, 3
    %p42 = por %p40, %p41
    %p44 = scmp.ne.s32.totalorder %s27, %s43
    %p45 = scmp.eq.s32.totalorder %s19, 0
    %p46 = por %p44, %p45
    %s47 = ssub.s32 %s13, %s20
    %p48 = scmp.eq.s32.totalorder %s47, 0
    %s50 = sadd.s32 %s49, 1
    %s51 = scalar_select %p48, %s49, %s50
    %p54 = pneg %p48
    %p55 = scmp.eq.s32.totalorder %s13, 3
    %p56 = por %p54, %p55
    %p57 = scmp.ne.s32.totalorder %s49, %s52
    %p58 = scmp.eq.s32.totalorder %s13, 0
    %p59 = por %p57, %p58
    %p60 = scmp.ne.s32.totalorder %s49, %s52
    %p61 = scmp.eq.s32.totalorder %s18, 3
    %p62 = por %p60, %p61
    %p63 = scmp.ne.s32.totalorder %s52, %s53
    %p64 = scmp.eq.s32.totalorder %s18, 0
    %p65 = por %p63, %p64
    %p66 = scmp.ne.s32.totalorder %s52, %s53
    %p67 = scmp.eq.s32.totalorder %s19, 3
    %p68 = por %p66, %p67
    %p70 = scmp.ne.s32.totalorder %s53, %s69
    %p71 = scmp.eq.s32.totalorder %s19, 0
    %p72 = por %p70, %p71
    %s74 = sadd.s32 %s73, 1
    %p77 = scmp.eq.s32.totalorder %s13, 3
    %p78 = scmp.ne.s32.totalorder %s73, %s75
    %p79 = scmp.eq.s32.totalorder %s13, 0
    %p80 = por %p78, %p79
    %p81 = scmp.ne.s32.totalorder %s73, %s75
    %p82 = scmp.eq.s32.totalorder %s18, 3
    %p83 = por %p81, %p82
    %p84 = scmp.ne.s32.totalorder %s75, %s76
    %p85 = scmp.eq.s32.totalorder %s18, 0
    %p86 = por %p84, %p85
    %p87 = scmp.ne.s32.totalorder %s75, %s76
    %p88 = scmp.eq.s32.totalorder %s19, 3
    %p89 = por %p87, %p88
    %p91 = scmp.ne.s32.totalorder %s76, %s90
    %p92 = scmp.eq.s32.totalorder %s19, 0
    %p93 = por %p91, %p92
    %s95 = sadd.s32 %s94, 1
    %p98 = scmp.eq.s32.totalorder %s13, 3
    %p99 = scmp.ne.s32.totalorder %s94, %s96
    %p100 = scmp.eq.s32.totalorder %s13, 0
    %p101 = por %p99, %p100
    %p102 = scmp.ne.s32.totalorder %s94, %s96
    %p103 = scmp.eq.s32.totalorder %s18, 3
    %p104 = por %p102, %p103
    %p105 = scmp.ne.s32.totalorder %s96, %s97
    %p106 = scmp.eq.s32.totalorder %s18, 0
    %p107 = por %p105, %p106
    %p108 = scmp.ne.s32.totalorder %s96, %s97
    %p109 = scmp.eq.s32.totalorder %s19, 3
    %p110 = por %p108, %p109
    %p112 = scmp.ne.s32.totalorder %s97, %s111
    %p113 = scmp.eq.s32.totalorder %s19, 0
    %p114 = por %p112, %p113
    %s116 = sadd.s32 %s115, 1
    %p119 = scmp.eq.s32.totalorder %s13, 3
    %p120 = scmp.ne.s32.totalorder %s115, %s117
    %p121 = scmp.eq.s32.totalorder %s13, 0
    %p122 = por %p120, %p121
    %p123 = scmp.ne.s32.totalorder %s115, %s117
    %p124 = scmp.eq.s32.totalorder %s18, 3
    %p125 = por %p123, %p124
    %p126 = scmp.ne.s32.totalorder %s117, %s118
    %p127 = scmp.eq.s32.totalorder %s18, 0
    %p128 = por %p126, %p127
    %p129 = scmp.ne.s32.totalorder %s117, %s118
    %p130 = scmp.eq.s32.totalorder %s19, 3
    %p131 = por %p129, %p130
    %p133 = scmp.ne.s32.totalorder %s118, %s132
    %p134 = scmp.eq.s32.totalorder %s19, 0
    %p135 = por %p133, %p134
    %s137 = sadd.s32 %s136, 1
    %p140 = scmp.eq.s32.totalorder %s13, 3
    %p141 = scmp.ne.s32.totalorder %s136, %s138
    %p142 = scmp.eq.s32.totalorder %s13, 0
    %p143 = por %p141, %p142
    %p144 = scmp.ne.s32.totalorder %s136, %s138
    %p145 = scmp.eq.s32.totalorder %s18, 3
    %p146 = por %p144, %p145
    %p147 = scmp.ne.s32.totalorder %s138, %s139
    %p148 = scmp.eq.s32.totalorder %s18, 0
    %p149 = por %p147, %p148
    %p150 = scmp.ne.s32.totalorder %s138, %s139
    %p151 = scmp.eq.s32.totalorder %s19, 3
    %p152 = por %p150, %p151
    %p154 = scmp.ne.s32.totalorder %s139, %s153
    %p155 = scmp.eq.s32.totalorder %s19, 0
    %p156 = por %p154, %p155
    %s158 = sadd.s32 %s157, 1
    %p161 = scmp.eq.s32.totalorder %s13, 3
    %p162 = scmp.ne.s32.totalorder %s157, %s159
    %p163 = scmp.eq.s32.totalorder %s13, 0
    %p164 = por %p162, %p163
    %p165 = scmp.ne.s32.totalorder %s157, %s159
    %p166 = scmp.eq.s32.totalorder %s18, 3
    %p167 = por %p165, %p166
    %p168 = scmp.ne.s32.totalorder %s159, %s160
    %p169 = scmp.eq.s32.totalorder %s18, 0
    %p170 = por %p168, %p169
    %p171 = scmp.ne.s32.totalorder %s159, %s160
    %p172 = scmp.eq.s32.totalorder %s19, 3
    %p173 = por %p171, %p172
    %p175 = scmp.ne.s32.totalorder %s160, %s174
    %p176 = scmp.eq.s32.totalorder %s19, 0
    %p177 = por %p175, %p176
    %s178 = ssub.s32 %s13, %s20
    %p179 = scmp.eq.s32.totalorder %s178, 0
    %s181 = sadd.s32 %s180, 1
    %s182 = scalar_select %p179, %s180, %s181
    %p185 = pneg %p179
    %p186 = scmp.eq.s32.totalorder %s13, 3
    %p187 = por %p185, %p186
    %p188 = scmp.ne.s32.totalorder %s180, %s183
    %p189 = scmp.eq.s32.totalorder %s13, 0
    %p190 = por %p188, %p189
    %p191 = scmp.ne.s32.totalorder %s180, %s183
    %p192 = scmp.eq.s32.totalorder %s18, 3
    %p193 = por %p191, %p192
    %p194 = scmp.ne.s32.totalorder %s183, %s184
    %p195 = scmp.eq.s32.totalorder %s18, 0
    %p196 = por %p194, %p195
    %p197 = scmp.ne.s32.totalorder %s183, %s184
    %p198 = scmp.eq.s32.totalorder %s19, 3
    %p199 = por %p197, %p198
    %p201 = scmp.ne.s32.totalorder %s184, %s200
    %p202 = scmp.eq.s32.totalorder %s19, 0
    %p203 = por %p201, %p202
    %p204 = scmp.le.s32.totalorder 1, %s13
    %p205 = scmp.lt.s32.totalorder %s13, 5
    %p206 = pnand %p204, %p205
    %p207 = pneg %p206
    // Predicated region
    $region9: #{tpu_custom_call.1} parent=5 // pred_check
      _
    $region10: #{tpu_custom_call.1} parent=5 // pred_check_branch
      %209 = sbr.rel (%p206) target = $region12
    $region11: #{tpu_custom_call.1} parent=5 // pred_region
      %s210 = ssub.s32 %s13, 1
      // Predicated region
      $region13: #{tpu_custom_call.1} parent=11 // pred_check
        %p211 = pneg %p86
      $region14: #{tpu_custom_call.1} parent=11 // pred_check_branch
        %213 = sbr.rel (%p211) target = $region16
      $region15: #{tpu_custom_call.1} parent=11 // pred_region
        _
      $region16: #{tpu_custom_call.1} parent=11 // pred_fallthru
        _
      // Predicated region
      $region17: #{tpu_custom_call.1} parent=11 // pred_check
        %p214 = pneg %p107
      $region18: #{tpu_custom_call.1} parent=11 // pred_check_branch
        %216 = sbr.rel (%p214) target = $region20
      $region19: #{tpu_custom_call.1} parent=11 // pred_region
        _
      $region20: #{tpu_custom_call.1} parent=11 // pred_fallthru
        _
      // Predicated region
      $region21: #{tpu_custom_call.1} parent=11 // pred_check
        %p217 = pneg %p128
      $region22: #{tpu_custom_call.1} parent=11 // pred_check_branch
        %219 = sbr.rel (%p217) target = $region24
      $region23: #{tpu_custom_call.1} parent=11 // pred_region
        _
      $region24: #{tpu_custom_call.1} parent=11 // pred_fallthru
        _
      // Predicated region
      $region25: #{tpu_custom_call.1} parent=11 // pred_check
        %p220 = pneg %p149
      $region26: #{tpu_custom_call.1} parent=11 // pred_check_branch
        %222 = sbr.rel (%p220) target = $region28
      $region27: #{tpu_custom_call.1} parent=11 // pred_region
        _
      $region28: #{tpu_custom_call.1} parent=11 // pred_fallthru
        _
      // Predicated region
      $region29: #{tpu_custom_call.1} parent=11 // pred_check
        %p223 = pneg %p170
      $region30: #{tpu_custom_call.1} parent=11 // pred_check_branch
        %225 = sbr.rel (%p223) target = $region32
      $region31: #{tpu_custom_call.1} parent=11 // pred_region
        _
      $region32: #{tpu_custom_call.1} parent=11 // pred_fallthru
        _
    $region12: #{tpu_custom_call.1} parent=5 // pred_fallthru
      _
    %p226 = scmp.lt.s32.totalorder %s13, 4
    // Predicated region
    $region33: #{tpu_custom_call.1} parent=5 // pred_check
      %p227 = pneg %p226
    $region34: #{tpu_custom_call.1} parent=5 // pred_check_branch
      %229 = sbr.rel (%p227) target = $region36
    $region35: #{tpu_custom_call.1} parent=5 // pred_region
      // Predicated region
      $region37: #{tpu_custom_call.1} parent=35 // pred_check
        %p230 = pneg %p33
      $region38: #{tpu_custom_call.1} parent=35 // pred_check_branch
        %232 = sbr.rel (%p230) target = $region40
      $region39: #{tpu_custom_call.1} parent=35 // pred_region
        %s233 = smul.u32 2, %s13
        %p234 = scmp.lt.s32.totalorder %s233, 7
        %s235 = scalar_select %p234, %s233, 7
        %s236 = smul.addr %s235, 8
        %s237 = scalar_lea.vmem %s0, %s236
        %s238 = smul.u32 2, %s13
      $region40: #{tpu_custom_call.1} parent=35 // pred_fallthru
        _
      // Predicated region
      $region41: #{tpu_custom_call.1} parent=35 // pred_check
        %p239 = pneg %p59
      $region42: #{tpu_custom_call.1} parent=35 // pred_check_branch
        %241 = sbr.rel (%p239) target = $region44
      $region43: #{tpu_custom_call.1} parent=35 // pred_region
        %s242 = smul.u32 2, %s13
        %p243 = scmp.lt.s32.totalorder %s242, 7
        %s244 = scalar_select %p243, %s242, 7
        %s245 = smul.addr %s244, 8
        %s246 = scalar_lea.vmem %s1, %s245
        %s247 = smul.u32 2, %s13
      $region44: #{tpu_custom_call.1} parent=35 // pred_fallthru
        _
    $region36: #{tpu_custom_call.1} parent=5 // pred_fallthru
      _
    %p248 = scmp.le.s32.totalorder 1, %s13
    %p249 = scmp.lt.s32.totalorder %s13, 5
    %p250 = pnand %p248, %p249
    %p251 = pneg %p250
    // Predicated region
    $region45: #{tpu_custom_call.1} parent=5 // pred_check
      _
    $region46: #{tpu_custom_call.1} parent=5 // pred_check_branch
      %253 = sbr.rel (%p250) target = $region48
    $region47: #{tpu_custom_call.1} parent=5 // pred_region
      %s254 = ssub.s32 %s13, 1
      %s255 = smul.u32 2, %s18
      %p256 = scmp.lt.s32.totalorder %s255, 7
      %s257 = scalar_select %p256, %s255, 7
      %s258 = smul.addr %s257, 8
      %s259 = scalar_lea.vmem %s0, %s258
      %p260 = pneg %p39
      %p261 = pneg %p36
      %s262 = smul.u32 2, %s18
      %p263 = scmp.lt.s32.totalorder %s262, 7
      %s264 = scalar_select %p263, %s262, 7
      %s265 = smul.addr %s264, 8
      %s266 = scalar_lea.vmem %s1, %s265
      %p267 = pneg %p65
      %p268 = pneg %p62
      %p269 = pneg %p86
      %p270 = pneg %p83
      %p271 = pneg %p107
      %p272 = pneg %p104
      %p273 = pneg %p128
      %p274 = pneg %p125
      %p275 = pneg %p149
      %p276 = pneg %p146
      %p277 = pneg %p170
      %p278 = pneg %p167
      %p279 = pneg %p196
      %p280 = pneg %p193
      %s281 = smul.u32 2, %s18
      %p282 = scmp.lt.s32.totalorder %s281, 7
      %s283 = scalar_select %p282, %s281, 7
      %s284 = smul.addr %s283, 8
      %s285 = scalar_lea.vmem %s7, %s284
      %s286 = smul.u32 2, %s18
      %p287 = scmp.lt.s32.totalorder %s286, 7
      %s288 = scalar_select %p287, %s286, 7
      %s289 = smul.addr %s288, 8
      %s290 = scalar_lea.vmem %s0, %s289
      %s291 = smul.u32 2, %s18
      %s292 = smul.u32 2, %s18
      %p293 = scmp.lt.s32.totalorder %s292, 7
      %s294 = scalar_select %p293, %s292, 7
      %s295 = smul.addr %s294, 8
      %s296 = scalar_lea.vmem %s1, %s295
      %s297 = smul.u32 2, %s18
      %s298 = smul.u32 2, %s18
      %p299 = scmp.lt.s32.totalorder %s298, 7
      %s300 = scalar_select %p299, %s298, 7
      %s301 = smul.addr %s300, 8
      %s302 = scalar_lea.vmem %s7, %s301
      %s303 = smul.u32 2, %s18
      %v304 = vld [vmem:[%s296] sm:$0xff]
      %v305 = vld [vmem:[%s296 + $0x8] sm:$0xff]
      %v306 = vld [vmem:[%s2] sm:$0xff]
      %v307 = vld [vmem:[%s2 + $0x8] sm:$0xf]
      %vm308 = vcmask 97280
      %v310 = vsel %vm308, %v304, 0
      %v313 = vsel %vm308, %v305, 0
      %vm315 = vcmask 1043456
      %v317 = vsel %vm315, %v307, 0
      %319 = vmatpush.msra.mxu0 0.0
      %320 = vmatpush.msra.mxu0 0.0
      %321 = vmatpush.msra.mxu0 0.0
      %322 = vmatpush.msra.mxu0 0.0
      %323 = vmatpush.msra.mxu0 0.0
      %324 = vmatpush.msra.mxu0 0.0
      %325 = vmatpush.msra.mxu0 0.0
      %326 = vmatpush.msra.mxu0 0.0
      %327 = vmatpush.msra.mxu0 0.0
      %328 = vmatpush.msra.mxu0 0.0
      %329 = vmatpush.msra.mxu0 0.0
      %330 = vmatpush.msra.mxu0 0.0
      %331 = vmatpush.msra.mxu0 0.0
      %332 = vmatpush.msra.mxu0 0.0
      %333 = vmatpush.msra.mxu0 %v317
      %334 = vmatpush.msra.mxu0 %v306
      %335 = vmatmul.f32.gmra.mxu0 %v310
      %v336 = vpop.f32.mrf.mxu0
      %v337 = vadd.f32 0.0, %v336
      %338 = vmatmul.f32.gmra.mxu0 %v313
      %v339 = vpop.f32.mrf.mxu0
      %v340 = vadd.f32 0.0, %v339
      %341 = vdwg.mxu0
      %v342 = vmul.f32 %v337, %v337
      %v343 = vmul.f32 %v340, %v340
      %346 = vrot.lane.b32.xlu0 %v342, 120
      %v347 = vpop.permute.xlu0 %346
      %348 = vrot.lane.b32.xlu0 %v343, 120
      %v349 = vpop.permute.xlu0 %348
      %v352 = vadd.f32 %v342, %v347
      %v353 = vadd.f32 %v343, %v349
      %354 = vrot.lane.b32.xlu0 %v342, 112
      %v355 = vpop.permute.xlu0 %354
      %356 = vrot.lane.b32.xlu0 %v343, 112
      %v357 = vpop.permute.xlu0 %356
      %v360 = vadd.f32 %v352, %v355
      %v361 = vadd.f32 %v353, %v357
      %v362 = vmax.f32 %v360, 1e-08
      %v363 = vmax.f32 %v361, 1e-08
      %v364 = vrsqrt.pop %v362
      %v365 = vmul.f32 %v364, %v362
      %v366 = vmul.f32 %v365, %v364
      %v367 = vmul.f32 0.5, %v366
      %v368 = vsub.f32 1.5, %v367
      %v369 = vmul.f32 %v364, %v368
      %v370 = vmul.f32 %v362, %v369
      %vm371 = vcmp.eq.f32.partialorder %v362, inf
      %v372 = vsel %vm371, %v362, %v370
      %vm373 = vcmp.eq.f32.partialorder %v362, 0.0
      %v374 = vand.u32 %v362, 2147483648
      %v375 = vsel %vm373, %v374, %v372
      %v376 = vrsqrt.pop %v363
      %v377 = vmul.f32 %v376, %v363
      %v378 = vmul.f32 %v377, %v376
      %v379 = vmul.f32 0.5, %v378
      %v380 = vsub.f32 1.5, %v379
      %v381 = vmul.f32 %v376, %v380
      %v382 = vmul.f32 %v363, %v381
      %vm383 = vcmp.eq.f32.partialorder %v363, inf
      %v384 = vsel %vm383, %v363, %v382
      %vm385 = vcmp.eq.f32.partialorder %v363, 0.0
      %v386 = vand.u32 %v363, 2147483648
      %v387 = vsel %vm385, %v386, %v384
      %v388 = vld [vmem:[%s290] sm:$0xff]
      %v389 = vld [vmem:[%s290 + $0x8] sm:$0xff]
      %v390 = vld [vmem:[%s3] sm:$0xff]
      %v391 = vld [vmem:[%s3 + $0x8] sm:$0xff]
      %v392 = vld [vmem:[%s4] sm:$0xff]
      %vm393 = vcmask 64512
      %v395 = vsel %vm393, %v375, 0
      %v398 = vsel %vm393, %v387, 0
      %400 = vmatpush.msra.mxu0 0.0
      %401 = vmatpush.msra.mxu0 0.0
      %402 = vmatpush.msra.mxu0 0.0
      %403 = vmatpush.msra.mxu0 0.0
      %404 = vmatpush.msra.mxu0 0.0
      %405 = vmatpush.msra.mxu0 0.0
      %406 = vmatpush.msra.mxu0 0.0
      %407 = vmatpush.msra.mxu0 0.0
      %408 = vmatpush.msra.mxu0 0.0
      %409 = vmatpush.msra.mxu0 0.0
      %410 = vmatpush.msra.mxu0 0.0
      %411 = vmatpush.msra.mxu0 0.0
      %412 = vmatpush.msra.mxu0 0.0
      %413 = vmatpush.msra.mxu0 0.0
      %414 = vmatpush.msra.mxu0 0.0
      %415 = vmatpush.msra.mxu0 %v392
      %416 = vmatmul.f32.gmra.mxu0 %v395
      %v417 = vpop.f32.mrf.mxu0
      %v418 = vadd.f32 0.0, %v417
      %419 = vmatmul.f32.gmra.mxu0 %v398
      %v420 = vpop.f32.mrf.mxu0
      %v421 = vadd.f32 0.0, %v420
      %422 = vdwg.mxu0
      %vm423 = vcmask 130048
      %v425 = vsel %vm423, %v388, 0
      %v428 = vsel %vm423, %v389, 0
      %430 = vmatpush.msra.mxu0 0.0
      %431 = vmatpush.msra.mxu0 0.0
      %432 = vmatpush.msra.mxu0 0.0
      %433 = vmatpush.msra.mxu0 0.0
      %434 = vmatpush.msra.mxu0 0.0
      %435 = vmatpush.msra.mxu0 0.0
      %436 = vmatpush.msra.mxu0 0.0
      %437 = vmatpush.msra.mxu0 0.0
      %438 = vmatpush.msra.mxu0 0.0
      %439 = vmatpush.msra.mxu0 0.0
      %440 = vmatpush.msra.mxu0 0.0
      %441 = vmatpush.msra.mxu0 0.0
      %442 = vmatpush.msra.mxu0 0.0
      %443 = vmatpush.msra.mxu0 0.0
      %444 = vmatpush.msra.mxu0 %v391
      %445 = vmatpush.msra.mxu0 %v390
      %446 = vmatmul.f32.gmra.mxu0 %v425
      %v447 = vpop.f32.mrf.mxu0
      %v448 = vadd.f32 %v418, %v447
      %449 = vmatmul.f32.gmra.mxu0 %v428
      %v450 = vpop.f32.mrf.mxu0
      %v451 = vadd.f32 %v421, %v450
      %452 = vdwg.mxu0
      %v453 = vld [vmem:[%s5] sm:$0x1]
      %v455 = vperm.slane %v453, 0
      %v457 = vadd.f32 %v448, %v455
      %v458 = vadd.f32 %v451, %v455
      %v459 = vld [vmem:[%s6] sm:$0xff]
      %v460 = vld [vmem:[%s6 + $0x8] sm:$0xff]
      %v461 = vld [vmem:[%s6 + $0x10] sm:$0xff]
      %vm462 = vcmask 195584
      %v464 = vsel %vm462, %v337, 0
      %v467 = vsel %vm462, %v340, 0
      %469 = vmatpush.msra.mxu0 0.0
      %470 = vmatpush.msra.mxu0 0.0
      %471 = vmatpush.msra.mxu0 0.0
      %472 = vmatpush.msra.mxu0 0.0
      %473 = vmatpush.msra.mxu0 0.0
      %474 = vmatpush.msra.mxu0 0.0
      %475 = vmatpush.msra.mxu0 0.0
      %476 = vmatpush.msra.mxu0 0.0
      %477 = vmatpush.msra.mxu0 0.0
      %478 = vmatpush.msra.mxu0 0.0
      %479 = vmatpush.msra.mxu0 0.0
      %480 = vmatpush.msra.mxu0 0.0
      %481 = vmatpush.msra.mxu0 0.0
      %482 = vmatpush.msra.mxu0 %v461
      %483 = vmatpush.msra.mxu0 %v460
      %484 = vmatpush.msra.mxu0 %v459
      %485 = vmatmul.f32.gmra.mxu0 %v464
      %v486 = vpop.f32.mrf.mxu0
      %v487 = vadd.f32 0.0, %v486
      %488 = vmatmul.f32.gmra.mxu0 %v467
      %v489 = vpop.f32.mrf.mxu0
      %v490 = vadd.f32 0.0, %v489
      %491 = vdwg.mxu0
      %vm492 = vcmask 261120
      %493 = vst.msk [vmem:[%s302] sm:$0xff] %vm492, %v457
      %494 = vst.msk [vmem:[%s302 + $0x8] sm:$0xff] %vm492, %v458
      %497 = vrot.lane.b32.xlu0 %v487, 32
      %v498 = vpop.permute.xlu0 %497
      %499 = vrot.lane.b32.xlu0 %v490, 32
      %v500 = vpop.permute.xlu0 %499
      %vm503 = vcmask 457984
      %504 = vst.msk [vmem:[%s302] sm:$0xff] %vm503, %v498
      %505 = vst.msk [vmem:[%s302 + $0x8] sm:$0xff] %vm503, %v500
      %s506 = smul.u32 2, %s18
      %p507 = scmp.lt.s32.totalorder %s506, 7
      %s508 = scalar_select %p507, %s506, 7
      %s509 = smul.addr %s508, 8
      %s510 = scalar_lea.vmem %s7, %s509
      // Predicated region
      $region49: #{tpu_custom_call.1} parent=47 // pred_check
        %p511 = pneg %p193
      $region50: #{tpu_custom_call.1} parent=47 // pred_check_branch
        %513 = sbr.rel (%p511) target = $region52
      $region51: #{tpu_custom_call.1} parent=47 // pred_region
        %s514 = smul.u32 2, %s18
      $region52: #{tpu_custom_call.1} parent=47 // pred_fallthru
        _
    $region48: #{tpu_custom_call.1} parent=5 // pred_fallthru
      _
    %p515 = scmp.le.s32.totalorder 2, %s13
    // Predicated region
    $region53: #{tpu_custom_call.1} parent=5 // pred_check
      %p516 = pneg %p515
    $region54: #{tpu_custom_call.1} parent=5 // pred_check_branch
      %518 = sbr.rel (%p516) target = $region56
    $region55: #{tpu_custom_call.1} parent=5 // pred_region
      %s519 = ssub.s32 %s13, 2
      // Predicated region
      $region57: #{tpu_custom_call.1} parent=55 // pred_check
        %p520 = pneg %p199
      $region58: #{tpu_custom_call.1} parent=55 // pred_check_branch
        %522 = sbr.rel (%p520) target = $region60
      $region59: #{tpu_custom_call.1} parent=55 // pred_region
        %s523 = smul.u32 2, %s19
        %p524 = scmp.lt.s32.totalorder %s523, 7
        %s525 = scalar_select %p524, %s523, 7
        %s526 = smul.addr %s525, 8
        %s527 = scalar_lea.vmem %s7, %s526
      $region60: #{tpu_custom_call.1} parent=55 // pred_fallthru
        _
    $region56: #{tpu_custom_call.1} parent=5 // pred_fallthru
      _
  $region6: #{tpu_custom_call.1} parent=0 // loop_footer
    %s17 = sadd.s32 1, %s13
  $region7: #{tpu_custom_call.1} parent=0 // loop_footer_branch
    %12 = sbr.rel target = $region3
  $region8: #{tpu_custom_call.1} parent=0 // loop_exit
    _

</llo_original>
